<compile_context>
chip_gen: v7x
topology: tpu7x:2x2x1
jax: 0.10.0
libtpu: 0.0.40
codegen_flags: <defaults>
</compile_context>

<pallas_src>
import jax
import jax.numpy as jnp
from jax.experimental import pallas as pl
from jax.experimental.pallas import tpu as pltpu

IN_FEATURES = 2
OUT_FEATURES = 2

_LANE = 128        # lane width; flat length is padded to a multiple of this
_ROWS_MAX = 4096   # max sublane rows per tile -> 4096*128*4 B = 2 MiB per operand tile


def _cdiv(a, b):
    return (a + b - 1) // b


def _round_up(n, m):
    return ((n + m - 1) // m) * m


def linear_kernel(w_ref, b_ref, x_ref, o_ref):
    """2->2 linear on interleaved lanes (pure VPU + XLU, no MXU).

    w_ref: SMEM (4,) f32 -> [w00, w01, w10, w11]  (row-major nn.Linear weight)
    b_ref: SMEM (2,) f32
    x_ref: VMEM (rows, 128) — flat row-major view of x (B, 2): even lanes hold
           feature 0, odd lanes hold feature 1.
    o_ref: VMEM (rows, 128) — same interleaving for the output.
    """
    x = x_ref[...].astype(jnp.float32)                 # (rows, 128), f32 math (v5e-safe)

    w00, w01, w10, w11 = w_ref[0], w_ref[1], w_ref[2], w_ref[3]
    b0, b1 = b_ref[0], b_ref[1]

    # Lane rotations (XLU slot): bring each lane's pair-partner into this lane.
    # pltpu.roll matches jnp.roll: roll(x, s)[i] = x[(i - s) % 128].
    x_next = pltpu.roll(x, shift=_LANE - 1, axis=1)    # x[i + 1] at lane i (== shift -1)
    x_prev = pltpu.roll(x, shift=1, axis=1)            # x[i - 1] at lane i

    lane = jax.lax.broadcasted_iota(jnp.int32, x.shape, 1)
    is_even = (lane % 2) == 0

    # Even lanes carry x0 -> emit y0; odd lanes carry x1 -> emit y1.
    y0 = w00 * x + w01 * x_next + b0
    y1 = w10 * x_prev + w11 * x + b1
    o_ref[...] = jnp.where(is_even, y0, y1).astype(o_ref.dtype)


def simple_nn_forward(x, weight, bias):
    """x: (B, IN); weight: (OUT, IN) (PyTorch layout); bias: (OUT,).

    Returns y = x @ weight.T + bias, shape (B, OUT).
    """
    B = x.shape[0]
    n = B * IN_FEATURES

    # Free row-major flatten: even flat indices = feature 0, odd = feature 1.
    x_flat = x.reshape(-1)
    padded_n = _round_up(n, _LANE)
    if padded_n != n:
        # Only wrapper-side copy left; at most 127 elements of padding
        # (no-op whenever B % 64 == 0).
        x_flat = jnp.pad(x_flat, (0, padded_n - n))

    total_rows = padded_n // _LANE
    if total_rows <= 8:
        rows = total_rows                       # single block == full array dims
    else:
        # >=2 tiles so the "parallel" grid axis can feed both v7x TensorCores,
        # capped at ~2 MiB per operand tile (fits every scoped-VMEM default).
        rows = min(_ROWS_MAX, _round_up(_cdiv(total_rows, 2), 8))
    num_tiles = _cdiv(total_rows, rows)         # ragged last block is grid-masked

    x2d = x_flat.reshape(total_rows, _LANE)      # free (row-major view)
    w_flat = weight.reshape(-1).astype(jnp.float32)   # (4,)
    b_flat = bias.reshape(-1).astype(jnp.float32)     # (2,)

    y2d = pl.pallas_call(
        linear_kernel,
        out_shape=jax.ShapeDtypeStruct((total_rows, _LANE), x.dtype),
        grid=(num_tiles,),
        in_specs=[
            pl.BlockSpec(memory_space=pltpu.MemorySpace.SMEM),   # weights
            pl.BlockSpec(memory_space=pltpu.MemorySpace.SMEM),   # bias
            pl.BlockSpec((rows, _LANE), lambda i: (i, 0)),       # x tile
        ],
        out_specs=pl.BlockSpec((rows, _LANE), lambda i: (i, 0)),
        compiler_params=pltpu.CompilerParams(
            dimension_semantics=("parallel",),
            vmem_limit_bytes=32 * 1024 * 1024,
        ),
        cost_estimate=pl.CostEstimate(
            flops=4 * padded_n, transcendentals=0, bytes_accessed=8 * padded_n),
    )(w_flat, b_flat, x2d)

    y_flat = y2d.reshape(-1)                     # free
    if padded_n != n:
        y_flat = y_flat[:n]
    return y_flat.reshape(B, OUT_FEATURES)       # free


if __name__ == "__main__":
    key = jax.random.PRNGKey(0)
    k_x, k_w, k_b, k_x2 = jax.random.split(key, 4)

    # Parameter init mimicking PyTorch's U(-1/sqrt(fan_in), +1/sqrt(fan_in)).
    bound = 1.0 / jnp.sqrt(jnp.float32(IN_FEATURES))
    weight = jax.random.uniform(
        k_w, (OUT_FEATURES, IN_FEATURES), minval=-bound, maxval=bound,
        dtype=jnp.float32)
    bias = jax.random.uniform(
        k_b, (OUT_FEATURES,), minval=-bound, maxval=bound, dtype=jnp.float32)

    # Small primary check (single-tile path).
    batch = 8
    x = jax.random.normal(k_x, (batch, IN_FEATURES), dtype=jnp.float32)
    y = jax.block_until_ready(simple_nn_forward(x, weight, bias))
    y_ref = x @ weight.T + bias
    assert y.shape == y_ref.shape, "shape mismatch vs reference"
    assert jnp.allclose(y, y_ref, atol=1e-5, rtol=1e-5), "mismatch vs reference"

    # Secondary check exercising the multi-tile + ragged-last-block path.
    batch2 = 900
    x2 = jax.random.normal(k_x2, (batch2, IN_FEATURES), dtype=jnp.float32)
    y2 = jax.block_until_ready(simple_nn_forward(x2, weight, bias))
    y2_ref = x2 @ weight.T + bias
    assert jnp.allclose(y2, y2_ref, atol=1e-5, rtol=1e-5), "mismatch vs reference (tiled)"

    print("KERNEL_OK")
</pallas_src>

<mosaic_0001>
module attributes {stable_mosaic.version = 11 : i64} {
  func.func @linear_kernel(%arg0: i32, %arg1: memref<4xf32, #tpu.memory_space<smem>>, %arg2: memref<2xf32, #tpu.memory_space<smem>>, %arg3: memref<1x128xf32, #tpu.memory_space<vmem>>, %arg4: memref<1x128xf32, #tpu.memory_space<vmem>>) attributes {dimension_semantics = [#tpu.dimension_semantics<parallel>], iteration_bounds = array<i64: 1>, scalar_prefetch = 0 : i64, scratch_operands = 0 : i64, tpu.core_type = #tpu.core_type<tc>, window_params = [{transform_indices = @transform_0, window_bounds = array<i64: 4>}, {transform_indices = @transform_1, window_bounds = array<i64: 2>}, {transform_indices = @transform_2, window_bounds = array<i64: 1, 128>}, {transform_indices = @transform_3, window_bounds = array<i64: 1, 128>}]} {
    %c0 = arith.constant 0 : index
    %c0_0 = arith.constant 0 : index
    %0 = vector.load %arg3[%c0, %c0_0] : memref<1x128xf32, #tpu.memory_space<vmem>>, vector<1x128xf32>
    %c0_1 = arith.constant 0 : index
    %1 = memref.load %arg1[%c0_1] : memref<4xf32, #tpu.memory_space<smem>>
    %c1 = arith.constant 1 : index
    %2 = memref.load %arg1[%c1] : memref<4xf32, #tpu.memory_space<smem>>
    %c2 = arith.constant 2 : index
    %3 = memref.load %arg1[%c2] : memref<4xf32, #tpu.memory_space<smem>>
    %c3 = arith.constant 3 : index
    %4 = memref.load %arg1[%c3] : memref<4xf32, #tpu.memory_space<smem>>
    %c0_2 = arith.constant 0 : index
    %5 = memref.load %arg2[%c0_2] : memref<2xf32, #tpu.memory_space<smem>>
    %c1_3 = arith.constant 1 : index
    %6 = memref.load %arg2[%c1_3] : memref<2xf32, #tpu.memory_space<smem>>
    %c127_i32 = arith.constant 127 : i32
    %7 = tpu.dynamic_rotate %0 by %c127_i32 dim 1 : vector<1x128xf32>, i32 -> vector<1x128xf32>
    %c1_i32 = arith.constant 1 : i32
    %8 = tpu.dynamic_rotate %0 by %c1_i32 dim 1 : vector<1x128xf32>, i32 -> vector<1x128xf32>
    %9 = tpu.iota {dimensions = array<i32: 1>} : vector<1x128xi32>
    %c2_i32 = arith.constant 2 : i32
    %c0_i32 = arith.constant 0 : i32
    %10 = arith.cmpi eq, %c2_i32, %c0_i32 : i32
    %c1_i32_4 = arith.constant 1 : i32
    %11 = arith.select %10, %c1_i32_4, %c2_i32 : i32
    %12 = vector.broadcast %11 : i32 to vector<1x128xi32>
    %13 = arith.remsi %9, %12 : vector<1x128xi32>
    %c0_i32_5 = arith.constant 0 : i32
    %14 = vector.broadcast %c0_i32_5 : i32 to vector<1x128xi32>
    %15 = arith.cmpi ne, %13, %14 : vector<1x128xi32>
    %c0_i32_6 = arith.constant 0 : i32
    %16 = vector.broadcast %c0_i32_6 : i32 to vector<1x128xi32>
    %17 = arith.cmpi slt, %13, %16 : vector<1x128xi32>
    %c0_i32_7 = arith.constant 0 : i32
    %18 = arith.cmpi slt, %11, %c0_i32_7 : i32
    %19 = vector.broadcast %18 : i1 to vector<1x128xi1>
    %20 = vector.broadcast %19 : vector<1x128xi1> to vector<1x128xi1>
    %21 = arith.xori %17, %20 : vector<1x128xi1>
    %22 = arith.andi %21, %15 : vector<1x128xi1>
    %23 = vector.broadcast %11 : i32 to vector<1x128xi32>
    %24 = arith.addi %13, %23 : vector<1x128xi32>
    %25 = arith.select %22, %24, %13 : vector<1x128xi1>, vector<1x128xi32>
    %c0_i32_8 = arith.constant 0 : i32
    %26 = vector.broadcast %c0_i32_8 : i32 to vector<1x128xi32>
    %27 = arith.cmpi eq, %25, %26 : vector<1x128xi32>
    %28 = vector.broadcast %1 : f32 to vector<1x128xf32>
    %29 = arith.mulf %28, %0 : vector<1x128xf32>
    %30 = vector.broadcast %2 : f32 to vector<1x128xf32>
    %31 = arith.mulf %30, %7 : vector<1x128xf32>
    %32 = arith.addf %29, %31 : vector<1x128xf32>
    %33 = vector.broadcast %5 : f32 to vector<1x128xf32>
    %34 = arith.addf %32, %33 : vector<1x128xf32>
    %35 = vector.broadcast %3 : f32 to vector<1x128xf32>
    %36 = arith.mulf %35, %8 : vector<1x128xf32>
    %37 = vector.broadcast %4 : f32 to vector<1x128xf32>
    %38 = arith.mulf %37, %0 : vector<1x128xf32>
    %39 = arith.addf %36, %38 : vector<1x128xf32>
    %40 = vector.broadcast %6 : f32 to vector<1x128xf32>
    %41 = arith.addf %39, %40 : vector<1x128xf32>
    %42 = arith.select %27, %34, %41 : vector<1x128xi1>, vector<1x128xf32>
    %c0_9 = arith.constant 0 : index
    %c0_10 = arith.constant 0 : index
    %43 = vector.load %arg4[%c0_9, %c0_10] : memref<1x128xf32, #tpu.memory_space<vmem>>, vector<1x128xf32>
    tpu.vector_store %arg4[%c0_9, %c0_10], %42 {strides = array<i32>} : memref<1x128xf32, #tpu.memory_space<vmem>>, vector<1x128xf32>,
    return
  }
  func.func @transform_0(%arg0: i32) -> i32 {
    %c0_i32 = arith.constant 0 : i32
    %c0_i32_0 = arith.constant 0 : i32
    return %c0_i32 : i32
  }
  func.func @transform_1(%arg0: i32) -> i32 {
    %c0_i32 = arith.constant 0 : i32
    %c0_i32_0 = arith.constant 0 : i32
    return %c0_i32 : i32
  }
  func.func @transform_2(%arg0: i32) -> (i32, i32) {
    %c0_i32 = arith.constant 0 : i32
    %c0_i32_0 = arith.constant 0 : i32
    return %arg0, %c0_i32 : i32, i32
  }
  func.func @transform_3(%arg0: i32) -> (i32, i32) {
    %c0_i32 = arith.constant 0 : i32
    %c0_i32_0 = arith.constant 0 : i32
    return %arg0, %c0_i32 : i32, i32
  }
}

</mosaic_0001>

<llo_original>
// kernel: tpu_custom_call.1
$region0: #{tpu_custom_call.1}
  #allocation0 [shape = 'u32[]', space=smem, size = 0x4, offset = 0x4, fixed_abs, tag = 'smem constant byte address 0x4 - core index']
  #allocation1 [shape = 'u32[144,128]{1,0:T(1,128)}', space=vmem, size = 0x12000, scoped, tag = 'internal scratch']
  %s0 = inlined_call_operand.hbm [shape: f32[4], index: 0, kind: input, shape index: {}]
  %s1 = inlined_call_operand.vmem [shape: f32[2], index: 1, kind: input, shape index: {}]
  %s2 = inlined_call_operand.vmem [shape: f32[1,128], index: 2, kind: input, shape index: {}]
  %s3 = inlined_call_operand.hbm [shape: f32[1,128], index: 3, kind: output, shape index: {}]
  %s4 = sld [smem:[#allocation0]]
  $region30: #{tpu_custom_call.1} parent=0
    _
  %s6 = ssub.s32 1, %s4
  %s7 = scalar_select 0, %s6, %s4
  $region1: #{tpu_custom_call.1} parent=0
    #allocation2 [shape = 'u8[512]{0}', space=smem, size = 0x200, scoped, tag = 'input window, operand 0, single buffered']
    #allocation3 [shape = 's32[1]{0}', space=sflag, size = 0x4, scoped, tag = 'scoped memory for tpu_custom_call.1']
    #allocation4 [shape = 's32[1]{0}', space=sflag, size = 0x4, scoped, tag = 'scoped memory for tpu_custom_call.1']
    #allocation5 [shape = 's32[1]{0}', space=sflag, size = 0x4, scoped, tag = 'scoped memory for tpu_custom_call.1']
    #allocation6 [shape = 'u8[512]{0}', space=smem, size = 0x200, scoped, tag = 'input window, operand 1, single buffered']
    #allocation7 [shape = 'u8[512]{0}', space=vmem, size = 0x400, scoped, tag = 'output window, operand 0, single buffered']
    %8 = vsyncpa [#allocation4], 0
    %9 = vsyncpa [#allocation5], 0
    %10 = vsyncpa [#allocation3], 0
    // Predicated region
    $region2: #{tpu_custom_call.1} parent=1 // pred_check
      _
    $region3: #{tpu_custom_call.1} parent=1 // pred_check_branch
      %12 = sbr.rel (0) target = $region5
    $region4: #{tpu_custom_call.1} parent=1 // pred_region
      %s14 = ssub.s32 16, 16
      %15 = vsyncadd [#allocation4], %s14
      %18 = dma.hbm_to_smem %s0, 16, [#allocation2], [#allocation4]
    $region5: #{tpu_custom_call.1} parent=1 // pred_fallthru
      _
    // Predicated region
    $region6: #{tpu_custom_call.1} parent=1 // pred_check
      _
    $region7: #{tpu_custom_call.1} parent=1 // pred_check_branch
      %20 = sbr.rel (0) target = $region9
    $region8: #{tpu_custom_call.1} parent=1 // pred_region
      %s22 = ssub.s32 16, 16
      %23 = vsyncadd [#allocation5], %s22
      %s25 = sshll.u32 %s1, 4
      %s26 = int_to_ptr.vmem [resolvable:$true] %s25
      %28 = dma.vmem_to_smem %s26, 16, [#allocation6], [#allocation5]
    $region9: #{tpu_custom_call.1} parent=1 // pred_fallthru
      _
    // Predicated region
    $region10: #{tpu_custom_call.1} parent=1 // pred_check
      _
    $region11: #{tpu_custom_call.1} parent=1 // pred_check_branch
      %30 = sbr.rel (0) target = $region13
    $region12: #{tpu_custom_call.1} parent=1 // pred_region
      _
    $region13: #{tpu_custom_call.1} parent=1 // pred_fallthru
      _
    // Predicated region
    $region14: #{tpu_custom_call.1} parent=1 // pred_check
      _
    $region15: #{tpu_custom_call.1} parent=1 // pred_check_branch
      %32 = sbr.rel (0) target = $region17
    $region16: #{tpu_custom_call.1} parent=1 // pred_region
      %33 = dma.done [#allocation4], 16
    $region17: #{tpu_custom_call.1} parent=1 // pred_fallthru
      _
    // Predicated region
    $region18: #{tpu_custom_call.1} parent=1 // pred_check
      _
    $region19: #{tpu_custom_call.1} parent=1 // pred_check_branch
      %35 = sbr.rel (0) target = $region21
    $region20: #{tpu_custom_call.1} parent=1 // pred_region
      %36 = dma.done [#allocation5], 16
    $region21: #{tpu_custom_call.1} parent=1 // pred_fallthru
      _
    %37 = sfence
    %v38 = vld [vmem:[%s2] sm:$0x1]
    %s39 = sld [smem:[#allocation2]]
    %s40 = sld [smem:[#allocation2 + $0x1]]
    %s41 = sld [smem:[#allocation2 + $0x2]]
    %s42 = sld [smem:[#allocation2 + $0x3]]
    %s43 = sld [smem:[#allocation6]]
    %s44 = sld [smem:[#allocation6 + $0x1]]
    %45 = vrot.lane.b32.xlu0 %v38, 127
    %v46 = vpop.permute.xlu0 %45
    %47 = vrot.lane.b32.xlu0 %v38, 1
    %v48 = vpop.permute.xlu0 %47
    %v49 = vlaneseq
    %v50 = vand.u32 %v49, 127
    %vm51 = vcmp.lt.s32.totalorder %v50, 0
    %v52 = vsub.s32 0, %v50
    %v53 = vsel %vm51, %v52, %v50
    %v54 = vshrl.u32 %v53, 1
    %v55 = vand.u32 %v53, 1
    %v56 = vsub.s32 0, %v55
    %v57 = vsel %vm51, %v56, %v55
    %vm58 = vcmp.ne.s32.totalorder %v57, 0
    %vm59 = vcmp.lt.s32.totalorder %v57, 0
    %vm60 = vmand %vm59, %vm58
    %v61 = vadd.s32 %v57, 2
    %v62 = vsel %vm60, %v61, %v57
    %vm63 = vcmp.eq.s32.totalorder %v62, 0
    %v64 = vstv %s39
    %v65 = vmul.f32 %v64, %v38
    %v66 = vstv %s40
    %v67 = vmul.f32 %v66, %v46
    %v68 = vadd.f32 %v65, %v67
    %v69 = vstv %s43
    %v70 = vadd.f32 %v68, %v69
    %v71 = vstv %s41
    %v72 = vmul.f32 %v71, %v48
    %v73 = vstv %s42
    %v74 = vmul.f32 %v73, %v38
    %v75 = vadd.f32 %v72, %v74
    %v76 = vstv %s44
    %v77 = vadd.f32 %v75, %v76
    %v78 = vsel %vm63, %v70, %v77
    %79 = vst [vmem:[#allocation7] sm:$0x1] %v78
    // Predicated region
    $region22: #{tpu_custom_call.1} parent=1 // pred_check
      _
    $region23: #{tpu_custom_call.1} parent=1 // pred_check_branch
      %81 = sbr.rel (0) target = $region25
    $region24: #{tpu_custom_call.1} parent=1 // pred_region
      %s83 = ssub.s32 16, 16
      %84 = vsyncadd [#allocation3], %s83
      %s86 = sshll.u32 [#allocation7], 4
      %s87 = int_to_ptr.vmem [resolvable:$true] %s86
      %89 = dma.vmem_to_hbm [thread:$0]  %s87, 16, %s3, [#allocation3]
    $region25: #{tpu_custom_call.1} parent=1 // pred_fallthru
      _
    // Predicated region
    $region26: #{tpu_custom_call.1} parent=1 // pred_check
      _
    $region27: #{tpu_custom_call.1} parent=1 // pred_check_branch
      %91 = sbr.rel (0) target = $region29
    $region28: #{tpu_custom_call.1} parent=1 // pred_region
      %92 = dma.done [#allocation3], 16
    $region29: #{tpu_custom_call.1} parent=1 // pred_fallthru
      _
    %93 = vsyncpa [#allocation3], 1
    %94 = vsyncpa [#allocation4], 1
    %95 = vsyncpa [#allocation5], 1

</llo_original>
